<compile_context>
chip_gen: v7x
topology: tpu7x:2x2x1
jax: 0.10.0
libtpu: 0.0.40
codegen_flags: <defaults>
</compile_context>

<pallas_src>
import jax
import jax.numpy as jnp
from jax.experimental import pallas as pl
from jax.experimental.pallas import tpu as pltpu

# ----- hyperparameters implied by the module (iris-sized) -----
N_CLASSES = 3                                  # opt.n_classes
CHANNELS = 1                                   # opt.channels
IMG_SIZE = 2                                   # opt.img_size
IMG_FLAT = CHANNELS * IMG_SIZE * IMG_SIZE      # 4  (matches "opt.n_classes + 4")
IN_DIM = IMG_FLAT + N_CLASSES                  # 7
X_DIM = 8                                      # img(4) | one-hot(3) | constant-1 lane(1)
H = 16                                         # hidden width of all three Linears
OUT = 1                                        # validity
PAD = 128                                      # lane-dense padding width
N_LAYERS = 4


def _leaky_relu(v):
    # LeakyReLU(0.2)
    return jnp.where(v > 0, v, 0.2 * v)


def _round_up(x, m):
    return (x + m - 1) // m * m


def discriminator_kernel(img_ref, lbl_ref, slab_ref, out_ref):
    """One fused Discriminator forward on a (TB, ...) batch tile.

    img_ref : (TB, 8)   f32   flattened image in lanes 0:4, zeros in lanes 4:8
    lbl_ref : (TB, 1)   int32 class labels
    slab_ref: (4, 128, 128) f32 packed weights:
        slab[0][0:4]  = W1 rows acting on the image
        slab[0][4:7]  = emb @ W1_emb        (embedding folded into layer 1 offline)
        slab[0][7]    = b1, with slab[0][7,16] = 1 so lane 16 of h carries a constant 1
        slab[k][0:16] = W_{k+1};  slab[k][16] = b_{k+1} (bias folded via the constant
                        lane), slab[k][16,16] = 1 for k<3 to keep the constant lane alive
    out_ref : (TB, 128) f32   lane-dense output, validity in lane 0
    """
    tb = img_ref.shape[0]

    # Fused nn.Embedding(labels) + torch.cat: build [img | one_hot(label) | 1]
    # with a single iota/compare (VPU) -- no gather, no concat, no extra matmul.
    lane = jax.lax.broadcasted_iota(jnp.int32, (tb, X_DIM), 1)
    lbl = lbl_ref[...]                                               # (TB, 1)
    hot = ((lane == lbl + IMG_FLAT) | (lane == X_DIM - 1)).astype(jnp.float32)
    x = img_ref[...] + hot                                           # (TB, 8)

    # Layer 1: Linear(7,16) with embedding + bias folded in -> LeakyReLU(0.2).
    w0 = slab_ref[0][:X_DIM, :]                   # aligned (8,128) slice of the slab
    h = _leaky_relu(jnp.dot(x, w0, preferred_element_type=jnp.float32))

    # Layers 2,3: Linear(16,16) -> Dropout(0.4) -> LeakyReLU(0.2) (bias via lane 16).
    # TODO(synk): Dropout(0.4) is identity here (eval-mode forward); a training-mode
    # mask would use pltpu.prng_seed / pltpu.prng_random_bits.
    h = _leaky_relu(jnp.dot(h, slab_ref[1], preferred_element_type=jnp.float32))
    h = _leaky_relu(jnp.dot(h, slab_ref[2], preferred_element_type=jnp.float32))

    # Layer 4: Linear(16,1), written lane-dense (valid value in lane 0).
    out_ref[...] = jnp.dot(h, slab_ref[3], preferred_element_type=jnp.float32)


def discriminator_forward(img, labels, params, *, batch_tile=256):
    """img: (B, CHANNELS, IMG_SIZE, IMG_SIZE) f32, labels: (B,) int -> validity (B, 1)."""
    B = img.shape[0]
    img_flat = img.reshape(B, -1).astype(jnp.float32)        # == img.view(B, -1)

    # Batch tiling: pad B to a sublane multiple; tile with a grid only when it pays off.
    tb = min(_round_up(batch_tile, 8), _round_up(B, 8))
    bp = _round_up(B, tb)
    n_tiles = bp // tb

    img8 = jnp.zeros((bp, X_DIM), jnp.float32).at[:B, :IMG_FLAT].set(img_flat)
    lbl = jnp.zeros((bp, 1), jnp.int32).at[:B, 0].set(labels.astype(jnp.int32))
    slab = params["slab"]
    out_shape = jax.ShapeDtypeStruct((bp, PAD), jnp.float32)

    if n_tiles == 1:
        # Small batch: grid-less call (no degenerate pipeline), all 3 inputs VMEM-resident.
        out = pl.pallas_call(
            discriminator_kernel,
            out_shape=out_shape,
            in_specs=[pl.BlockSpec(memory_space=pltpu.MemorySpace.VMEM)] * 3,
            out_specs=pl.BlockSpec(memory_space=pltpu.MemorySpace.VMEM),
        )(img8, lbl, slab)
    else:
        # Large batch: 1-D grid over batch tiles.  The weight slab uses a constant
        # block index, so it is DMA'd once and stays VMEM-resident across steps;
        # "parallel" lets the batch axis shard across TensorCores (v7x megacore).
        out = pl.pallas_call(
            discriminator_kernel,
            out_shape=out_shape,
            grid_spec=pltpu.PrefetchScalarGridSpec(
                num_scalar_prefetch=0,
                grid=(n_tiles,),
                in_specs=[
                    pl.BlockSpec((tb, X_DIM), lambda i: (i, 0)),
                    pl.BlockSpec((tb, 1), lambda i: (i, 0)),
                    pl.BlockSpec((N_LAYERS, PAD, PAD), lambda i: (0, 0, 0)),
                ],
                out_specs=pl.BlockSpec((tb, PAD), lambda i: (i, 0)),
            ),
            compiler_params=pltpu.CompilerParams(
                dimension_semantics=("parallel",)),
        )(img8, lbl, slab)

    return out[:B, :OUT]                                      # validity (B, 1)


def init_params(key):
    """PyTorch-shaped params plus the one-time packed/folded (4,128,128) weight slab."""
    ks = jax.random.split(key, 5)

    def lin(k, fan_in, fan_out):
        # PyTorch Linear default init: U(-1/sqrt(fan_in), 1/sqrt(fan_in)); stored (in, out).
        bound = 1.0 / jnp.sqrt(jnp.float32(fan_in))
        kw, kb = jax.random.split(k)
        w = jax.random.uniform(kw, (fan_in, fan_out), jnp.float32, -bound, bound)
        b = jax.random.uniform(kb, (fan_out,), jnp.float32, -bound, bound)
        return w, b

    w1, b1 = lin(ks[0], IN_DIM, H)        # (7, 16)
    w2, b2 = lin(ks[1], H, H)             # (16, 16)
    w3, b3 = lin(ks[2], H, H)             # (16, 16)
    w4, b4 = lin(ks[3], H, OUT)           # (16, 1)
    emb = jax.random.normal(ks[4], (N_CLASSES, N_CLASSES), jnp.float32)

    slab = jnp.zeros((N_LAYERS, PAD, PAD), jnp.float32)

    # Layer 1 block: image rows, offline-folded embedding rows, bias row (driven by the
    # constant-1 input lane), and the [7,16]=1 entry that seeds the constant-1 lane of h.
    l0 = jnp.zeros((PAD, PAD), jnp.float32)
    l0 = l0.at[:IMG_FLAT, :H].set(w1[:IMG_FLAT])
    l0 = l0.at[IMG_FLAT:IN_DIM, :H].set(emb @ w1[IMG_FLAT:])   # fold Embedding into W1
    l0 = l0.at[X_DIM - 1, :H].set(b1)
    l0 = l0.at[X_DIM - 1, H].set(1.0)
    slab = slab.at[0].set(l0)

    for k, (w, b) in enumerate(((w2, b2), (w3, b3), (w4, b4)), start=1):
        lk = jnp.zeros((PAD, PAD), jnp.float32)
        lk = lk.at[:H, :w.shape[1]].set(w)
        lk = lk.at[H, :w.shape[1]].set(b)          # bias row, driven by constant lane 16
        if k < N_LAYERS - 1:
            lk = lk.at[H, H].set(1.0)              # keep the constant-1 lane alive
        slab = slab.at[k].set(lk)

    raw = dict(emb=emb, w1=w1, b1=b1, w2=w2, b2=b2, w3=w3, b3=b3, w4=w4, b4=b4)
    return {"slab": slab, "raw": raw}


def reference_forward(img, labels, raw):
    """Pure-JAX reference of the PyTorch module (eval-mode Dropout = identity)."""
    B = img.shape[0]
    d_in = jnp.concatenate(
        [img.reshape(B, -1).astype(jnp.float32), raw["emb"][labels]], axis=-1)
    h = _leaky_relu(d_in @ raw["w1"] + raw["b1"])
    h = _leaky_relu(h @ raw["w2"] + raw["b2"])
    h = _leaky_relu(h @ raw["w3"] + raw["b3"])
    return h @ raw["w4"] + raw["b4"]


if __name__ == "__main__":
    key = jax.random.PRNGKey(0)
    k_par, k_img, k_lab = jax.random.split(key, 3)
    params = init_params(k_par)

    # --- small-batch path: grid-less, fully VMEM-resident ---
    B = 8
    img = jax.random.normal(k_img, (B, CHANNELS, IMG_SIZE, IMG_SIZE), jnp.float32)
    labels = jax.random.randint(k_lab, (B,), 0, N_CLASSES)
    validity = discriminator_forward(img, labels, params)
    jax.block_until_ready(validity)
    assert validity.shape == (B, OUT)
    assert validity.dtype == jnp.float32
    assert jnp.allclose(validity, reference_forward(img, labels, params["raw"]),
                        atol=1e-4, rtol=1e-4)

    # --- larger-batch path: 1-D grid over batch tiles, slab VMEM-resident, "parallel" ---
    B2 = 48
    img2 = jax.random.normal(k_img, (B2, CHANNELS, IMG_SIZE, IMG_SIZE), jnp.float32)
    labels2 = jax.random.randint(k_lab, (B2,), 0, N_CLASSES)
    validity2 = discriminator_forward(img2, labels2, params, batch_tile=16)
    jax.block_until_ready(validity2)
    assert validity2.shape == (B2, OUT)
    assert jnp.allclose(validity2, reference_forward(img2, labels2, params["raw"]),
                        atol=1e-4, rtol=1e-4)

    print("KERNEL_OK")
</pallas_src>

<mosaic_0001>
module attributes {stable_mosaic.version = 11 : i64} {
  func.func @discriminator_kernel(%arg0: memref<8x8xf32, #tpu.memory_space<vmem>>, %arg1: memref<8x1xi32, #tpu.memory_space<vmem>>, %arg2: memref<4x128x128xf32, #tpu.memory_space<vmem>>, %arg3: memref<8x128xf32, #tpu.memory_space<vmem>>) attributes {dimension_semantics = [], scalar_prefetch = 0 : i64, scratch_operands = 0 : i64, tpu.core_type = #tpu.core_type<tc>} {
    %0 = tpu.iota {dimensions = array<i32: 1>} : vector<8x8xi32>
    %c0 = arith.constant 0 : index
    %c0_0 = arith.constant 0 : index
    %1 = vector.load %arg1[%c0, %c0_0] : memref<8x1xi32, #tpu.memory_space<vmem>>, vector<8x1xi32>
    %c4_i32 = arith.constant 4 : i32
    %2 = vector.broadcast %c4_i32 : i32 to vector<8x1xi32>
    %3 = arith.addi %1, %2 : vector<8x1xi32>
    %4 = vector.broadcast %3 : vector<8x1xi32> to vector<8x8xi32>
    %5 = arith.cmpi eq, %0, %4 : vector<8x8xi32>
    %c7_i32 = arith.constant 7 : i32
    %6 = vector.broadcast %c7_i32 : i32 to vector<8x8xi32>
    %7 = arith.cmpi eq, %0, %6 : vector<8x8xi32>
    %8 = arith.ori %5, %7 : vector<8x8xi1>
    %9 = arith.extui %8 : vector<8x8xi1> to vector<8x8xi32>
    %10 = arith.sitofp %9 : vector<8x8xi32> to vector<8x8xf32>
    %c0_1 = arith.constant 0 : index
    %c0_2 = arith.constant 0 : index
    %11 = vector.load %arg0[%c0_1, %c0_2] : memref<8x8xf32, #tpu.memory_space<vmem>>, vector<8x8xf32>
    %12 = arith.addf %11, %10 : vector<8x8xf32>
    %c0_3 = arith.constant 0 : index
    %c0_4 = arith.constant 0 : index
    %c0_5 = arith.constant 0 : index
    %13 = vector.load %arg2[%c0_3, %c0_4, %c0_5] : memref<4x128x128xf32, #tpu.memory_space<vmem>>, vector<1x128x128xf32>
    %14 = vector.shape_cast %13 : vector<1x128x128xf32> to vector<128x128xf32>
    %15 = vector.extract_strided_slice %14 {offsets = [0, 0], sizes = [8, 128], strides = [1, 1]} : vector<128x128xf32> to vector<8x128xf32>
    %cst = arith.constant dense<0.000000e+00> : vector<8x128xf32>
    %16 = tpu.matmul %12, %15, %cst {dimension_numbers = #tpu.dot_dimension_numbers<[1], [0], [0], [1], [0, 0, 1, 1], [], []>} : vector<8x8xf32>, vector<8x128xf32>, vector<8x128xf32> -> vector<8x128xf32>
    %cst_6 = arith.constant 0.000000e+00 : f32
    %17 = vector.broadcast %cst_6 : f32 to vector<8x128xf32>
    %18 = arith.cmpf ogt, %16, %17 : vector<8x128xf32>
    %cst_7 = arith.constant 2.000000e-01 : f32
    %19 = vector.broadcast %cst_7 : f32 to vector<8x128xf32>
    %20 = arith.mulf %19, %16 : vector<8x128xf32>
    %21 = arith.select %18, %16, %20 : vector<8x128xi1>, vector<8x128xf32>
    %c1 = arith.constant 1 : index
    %c0_8 = arith.constant 0 : index
    %c0_9 = arith.constant 0 : index
    %22 = vector.load %arg2[%c1, %c0_8, %c0_9] : memref<4x128x128xf32, #tpu.memory_space<vmem>>, vector<1x128x128xf32>
    %23 = vector.shape_cast %22 : vector<1x128x128xf32> to vector<128x128xf32>
    %cst_10 = arith.constant dense<0.000000e+00> : vector<8x128xf32>
    %24 = tpu.matmul %21, %23, %cst_10 {dimension_numbers = #tpu.dot_dimension_numbers<[1], [0], [0], [1], [0, 0, 1, 1], [], []>} : vector<8x128xf32>, vector<128x128xf32>, vector<8x128xf32> -> vector<8x128xf32>
    %cst_11 = arith.constant 0.000000e+00 : f32
    %25 = vector.broadcast %cst_11 : f32 to vector<8x128xf32>
    %26 = arith.cmpf ogt, %24, %25 : vector<8x128xf32>
    %cst_12 = arith.constant 2.000000e-01 : f32
    %27 = vector.broadcast %cst_12 : f32 to vector<8x128xf32>
    %28 = arith.mulf %27, %24 : vector<8x128xf32>
    %29 = arith.select %26, %24, %28 : vector<8x128xi1>, vector<8x128xf32>
    %c2 = arith.constant 2 : index
    %c0_13 = arith.constant 0 : index
    %c0_14 = arith.constant 0 : index
    %30 = vector.load %arg2[%c2, %c0_13, %c0_14] : memref<4x128x128xf32, #tpu.memory_space<vmem>>, vector<1x128x128xf32>
    %31 = vector.shape_cast %30 : vector<1x128x128xf32> to vector<128x128xf32>
    %cst_15 = arith.constant dense<0.000000e+00> : vector<8x128xf32>
    %32 = tpu.matmul %29, %31, %cst_15 {dimension_numbers = #tpu.dot_dimension_numbers<[1], [0], [0], [1], [0, 0, 1, 1], [], []>} : vector<8x128xf32>, vector<128x128xf32>, vector<8x128xf32> -> vector<8x128xf32>
    %cst_16 = arith.constant 0.000000e+00 : f32
    %33 = vector.broadcast %cst_16 : f32 to vector<8x128xf32>
    %34 = arith.cmpf ogt, %32, %33 : vector<8x128xf32>
    %cst_17 = arith.constant 2.000000e-01 : f32
    %35 = vector.broadcast %cst_17 : f32 to vector<8x128xf32>
    %36 = arith.mulf %35, %32 : vector<8x128xf32>
    %37 = arith.select %34, %32, %36 : vector<8x128xi1>, vector<8x128xf32>
    %c3 = arith.constant 3 : index
    %c0_18 = arith.constant 0 : index
    %c0_19 = arith.constant 0 : index
    %38 = vector.load %arg2[%c3, %c0_18, %c0_19] : memref<4x128x128xf32, #tpu.memory_space<vmem>>, vector<1x128x128xf32>
    %39 = vector.shape_cast %38 : vector<1x128x128xf32> to vector<128x128xf32>
    %cst_20 = arith.constant dense<0.000000e+00> : vector<8x128xf32>
    %40 = tpu.matmul %37, %39, %cst_20 {dimension_numbers = #tpu.dot_dimension_numbers<[1], [0], [0], [1], [0, 0, 1, 1], [], []>} : vector<8x128xf32>, vector<128x128xf32>, vector<8x128xf32> -> vector<8x128xf32>
    %c0_21 = arith.constant 0 : index
    %c0_22 = arith.constant 0 : index
    %41 = vector.load %arg3[%c0_21, %c0_22] : memref<8x128xf32, #tpu.memory_space<vmem>>, vector<8x128xf32>
    tpu.vector_store %arg3[%c0_21, %c0_22], %40 {strides = array<i32>} : memref<8x128xf32, #tpu.memory_space<vmem>>, vector<8x128xf32>,
    return
  }
}

</mosaic_0001>

<llo_original>
// kernel: tpu_custom_call.1
$region0: #{tpu_custom_call.1}
  #allocation0 [shape = 'u32[]', space=smem, size = 0x4, offset = 0x4, fixed_abs, tag = 'smem constant byte address 0x4 - core index']
  #allocation1 [shape = 'u32[144,128]{1,0:T(1,128)}', space=vmem, size = 0x12000, scoped, tag = 'internal scratch']
  %s0 = inlined_call_operand.vmem [shape: f32[8,8], index: 0, kind: input, shape index: {}]
  %s1 = inlined_call_operand.vmem [shape: s32[8,1], index: 1, kind: input, shape index: {}]
  %s2 = inlined_call_operand.hbm [shape: f32[4,128,128], index: 2, kind: input, shape index: {}]
  %s3 = inlined_call_operand.hbm [shape: f32[8,128], index: 3, kind: output, shape index: {}]
  %s4 = sld [smem:[#allocation0]]
  $region26: #{tpu_custom_call.1} parent=0
    _
  %s6 = ssub.s32 1, %s4
  %s7 = scalar_select 0, %s6, %s4
  $region1: #{tpu_custom_call.1} parent=0
    #allocation2 [shape = 'u8[262144]{0}', space=vmem, size = 0x40000, scoped, tag = 'input window, operand 2, single buffered']
    #allocation3 [shape = 's32[1]{0}', space=sflag, size = 0x4, scoped, tag = 'scoped memory for tpu_custom_call.1']
    #allocation4 [shape = 's32[1]{0}', space=sflag, size = 0x4, scoped, tag = 'scoped memory for tpu_custom_call.1']
    #allocation5 [shape = 'u8[4096]{0}', space=vmem, size = 0x1000, scoped, tag = 'output window, operand 0, single buffered']
    %8 = vsyncpa [#allocation3], 0
    %9 = vsyncpa [#allocation4], 0
    // Predicated region
    $region2: #{tpu_custom_call.1} parent=1 // pred_check
      _
    $region3: #{tpu_custom_call.1} parent=1 // pred_check_branch
      %11 = sbr.rel (0) target = $region5
    $region4: #{tpu_custom_call.1} parent=1 // pred_region
      _
    $region5: #{tpu_custom_call.1} parent=1 // pred_fallthru
      _
    // Predicated region
    $region6: #{tpu_custom_call.1} parent=1 // pred_check
      _
    $region7: #{tpu_custom_call.1} parent=1 // pred_check_branch
      %13 = sbr.rel (0) target = $region9
    $region8: #{tpu_custom_call.1} parent=1 // pred_region
      _
    $region9: #{tpu_custom_call.1} parent=1 // pred_fallthru
      _
    // Predicated region
    $region10: #{tpu_custom_call.1} parent=1 // pred_check
      _
    $region11: #{tpu_custom_call.1} parent=1 // pred_check_branch
      %15 = sbr.rel (0) target = $region13
    $region12: #{tpu_custom_call.1} parent=1 // pred_region
      %s17 = ssub.s32 8192, 8192
      %18 = vsyncadd [#allocation3], %s17
      %s19 = sshll.u32 [#allocation2], 4
      %s20 = int_to_ptr.vmem [resolvable:$true] %s19
      %25 = dma.hbm_to_vmem [thread:$0]  %s2, 8192, %s20, [#allocation3], 128, 128, 8
    $region13: #{tpu_custom_call.1} parent=1 // pred_fallthru
      _
    // Predicated region
    $region14: #{tpu_custom_call.1} parent=1 // pred_check
      _
    $region15: #{tpu_custom_call.1} parent=1 // pred_check_branch
      %27 = sbr.rel (0) target = $region17
    $region16: #{tpu_custom_call.1} parent=1 // pred_region
      %28 = dma.done [#allocation3], 8192
    $region17: #{tpu_custom_call.1} parent=1 // pred_fallthru
      _
    %v29 = vlaneseq
    %v30 = vand.u32 %v29, 127
    %v31 = vld [vmem:[%s1] sm:$0xff]
    %v32 = vadd.s32 %v31, 4
    %33 = vset.pattern.permute.xlu0 0
    %34 = vperm.xlu0 %33, %v32
    %v35 = vpop.permute.xlu0 %34
    %vm36 = vcmp.eq.s32.totalorder %v30, %v35
    %vm37 = vcmp.eq.s32.totalorder %v30, 7
    %vm38 = vmor %vm36, %vm37
    %v39 = vsel %vm38, 1, 0
    %v40 = vcvt.s32.f32 %v39
    %v41 = vld [vmem:[%s0] sm:$0xff]
    %v42 = vadd.f32 %v41, %v40
    %v43 = vld [vmem:[#allocation2] sm:$0xff]
    %vm44 = vcmask 64512
    %v46 = vsel %vm44, %v42, 0
    %48 = vmatprep.subr.mxu0 0.0
    %49 = vmatpush1.msra.mxu0 %v43
    %50 = vmatprep.subr.mxu0 0.0
    %51 = vmatpush1.msra.mxu0 0.0
    %52 = vmatprep.subr.mxu0 0.0
    %53 = vmatpush1.msra.mxu0 0.0
    %54 = vmatprep.subr.mxu0 0.0
    %55 = vmatpush1.msra.mxu0 0.0
    %56 = vmatprep.subr.mxu0 0.0
    %57 = vmatpush1.msra.mxu0 0.0
    %58 = vmatprep.subr.mxu0 0.0
    %59 = vmatpush1.msra.mxu0 0.0
    %60 = vmatprep.subr.mxu0 0.0
    %61 = vmatpush1.msra.mxu0 0.0
    %62 = vmatprep.subr.mxu0 0.0
    %63 = vmatpush1.msra.mxu0 0.0
    %64 = vmatprep.subr.mxu0 0.0
    %65 = vmatpush1.msra.mxu0 0.0
    %66 = vmatprep.subr.mxu0 0.0
    %67 = vmatpush1.msra.mxu0 0.0
    %68 = vmatprep.subr.mxu0 0.0
    %69 = vmatpush1.msra.mxu0 0.0
    %70 = vmatprep.subr.mxu0 0.0
    %71 = vmatpush1.msra.mxu0 0.0
    %72 = vmatprep.subr.mxu0 0.0
    %73 = vmatpush1.msra.mxu0 0.0
    %74 = vmatprep.subr.mxu0 0.0
    %75 = vmatpush1.msra.mxu0 0.0
    %76 = vmatprep.subr.mxu0 0.0
    %77 = vmatpush1.msra.mxu0 0.0
    %78 = vmatprep.subr.mxu0 0.0
    %79 = vmatpush1.msra.mxu0 0.0
    %80 = vmatprep.subr.mxu0 0.0
    %81 = vmatpush1.msra.mxu0 0.0
    %82 = vmatprep.subr.mxu0 0.0
    %83 = vmatpush1.msra.mxu0 0.0
    %84 = vmatprep.subr.mxu0 0.0
    %85 = vmatpush1.msra.mxu0 0.0
    %86 = vmatprep.subr.mxu0 0.0
    %87 = vmatpush1.msra.mxu0 0.0
    %88 = vmatprep.subr.mxu0 0.0
    %89 = vmatpush1.msra.mxu0 0.0
    %90 = vmatprep.subr.mxu0 0.0
    %91 = vmatpush1.msra.mxu0 0.0
    %92 = vmatprep.subr.mxu0 0.0
    %93 = vmatpush1.msra.mxu0 0.0
    %94 = vmatprep.subr.mxu0 0.0
    %95 = vmatpush1.msra.mxu0 0.0
    %96 = vmatprep.subr.mxu0 0.0
    %97 = vmatpush1.msra.mxu0 0.0
    %98 = vmatprep.subr.mxu0 0.0
    %99 = vmatpush1.msra.mxu0 0.0
    %100 = vmatprep.subr.mxu0 0.0
    %101 = vmatpush1.msra.mxu0 0.0
    %102 = vmatprep.subr.mxu0 0.0
    %103 = vmatpush1.msra.mxu0 0.0
    %104 = vmatprep.subr.mxu0 0.0
    %105 = vmatpush1.msra.mxu0 0.0
    %106 = vmatprep.subr.mxu0 0.0
    %107 = vmatpush1.msra.mxu0 0.0
    %108 = vmatprep.subr.mxu0 0.0
    %109 = vmatpush1.msra.mxu0 0.0
    %110 = vmatprep.subr.mxu0 0.0
    %111 = vmatpush1.msra.mxu0 0.0
    %112 = vmatprep.mubr.f32.mxu0 0.0
    %113 = vmatmul.mubr.f32.gmra.mrb[0].mxu0 %v46
    %v114 = vpop.f32.mrb[0].mxu0
    %v115 = vadd.f32 0.0, %v114
    %v116 = vpop.f32.mrb[0].mxu0
    %117 = vdwg.mxu0
    %vm118 = vcmp.gt.f32.partialorder %v115, 0.0
    %v119 = vmul.f32 %v115, 0.2
    %v120 = vsel %vm118, %v115, %v119
    %s121 = scalar_lea.vmem [#allocation2], 128
    %v122 = vld [vmem:[%s121] sm:$0xff]
    %v123 = vld [vmem:[%s121 + $0x8] sm:$0xff]
    %v124 = vld [vmem:[%s121 + $0x10] sm:$0xff]
    %v125 = vld [vmem:[%s121 + $0x18] sm:$0xff]
    %v126 = vld [vmem:[%s121 + $0x20] sm:$0xff]
    %v127 = vld [vmem:[%s121 + $0x28] sm:$0xff]
    %v128 = vld [vmem:[%s121 + $0x30] sm:$0xff]
    %v129 = vld [vmem:[%s121 + $0x38] sm:$0xff]
    %v130 = vld [vmem:[%s121 + $0x40] sm:$0xff]
    %v131 = vld [vmem:[%s121 + $0x48] sm:$0xff]
    %v132 = vld [vmem:[%s121 + $0x50] sm:$0xff]
    %v133 = vld [vmem:[%s121 + $0x58] sm:$0xff]
    %v134 = vld [vmem:[%s121 + $0x60] sm:$0xff]
    %v135 = vld [vmem:[%s121 + $0x68] sm:$0xff]
    %v136 = vld [vmem:[%s121 + $0x70] sm:$0xff]
    %v137 = vld [vmem:[%s121 + $0x78] sm:$0xff]
    %138 = vmatprep.subr.mxu0 0.0
    %139 = vmatpush1.msra.mxu0 %v122
    %140 = vmatprep.subr.mxu0 0.0
    %141 = vmatpush1.msra.mxu0 %v123
    %142 = vmatprep.subr.mxu0 0.0
    %143 = vmatpush1.msra.mxu0 %v124
    %144 = vmatprep.subr.mxu0 0.0
    %145 = vmatpush1.msra.mxu0 %v125
    %146 = vmatprep.subr.mxu0 0.0
    %147 = vmatpush1.msra.mxu0 %v126
    %148 = vmatprep.subr.mxu0 0.0
    %149 = vmatpush1.msra.mxu0 %v127
    %150 = vmatprep.subr.mxu0 0.0
    %151 = vmatpush1.msra.mxu0 %v128
    %152 = vmatprep.subr.mxu0 0.0
    %153 = vmatpush1.msra.mxu0 %v129
    %154 = vmatprep.subr.mxu0 0.0
    %155 = vmatpush1.msra.mxu0 %v130
    %156 = vmatprep.subr.mxu0 0.0
    %157 = vmatpush1.msra.mxu0 %v131
    %158 = vmatprep.subr.mxu0 0.0
    %159 = vmatpush1.msra.mxu0 %v132
    %160 = vmatprep.subr.mxu0 0.0
    %161 = vmatpush1.msra.mxu0 %v133
    %162 = vmatprep.subr.mxu0 0.0
    %163 = vmatpush1.msra.mxu0 %v134
    %164 = vmatprep.subr.mxu0 0.0
    %165 = vmatpush1.msra.mxu0 %v135
    %166 = vmatprep.subr.mxu0 0.0
    %167 = vmatpush1.msra.mxu0 %v136
    %168 = vmatprep.subr.mxu0 0.0
    %169 = vmatpush1.msra.mxu0 %v137
    %170 = vmatprep.subr.mxu0 0.0
    %171 = vmatpush1.msra.mxu0 0.0
    %172 = vmatprep.subr.mxu0 0.0
    %173 = vmatpush1.msra.mxu0 0.0
    %174 = vmatprep.subr.mxu0 0.0
    %175 = vmatpush1.msra.mxu0 0.0
    %176 = vmatprep.subr.mxu0 0.0
    %177 = vmatpush1.msra.mxu0 0.0
    %178 = vmatprep.subr.mxu0 0.0
    %179 = vmatpush1.msra.mxu0 0.0
    %180 = vmatprep.subr.mxu0 0.0
    %181 = vmatpush1.msra.mxu0 0.0
    %182 = vmatprep.subr.mxu0 0.0
    %183 = vmatpush1.msra.mxu0 0.0
    %184 = vmatprep.subr.mxu0 0.0
    %185 = vmatpush1.msra.mxu0 0.0
    %186 = vmatprep.subr.mxu0 0.0
    %187 = vmatpush1.msra.mxu0 0.0
    %188 = vmatprep.subr.mxu0 0.0
    %189 = vmatpush1.msra.mxu0 0.0
    %190 = vmatprep.subr.mxu0 0.0
    %191 = vmatpush1.msra.mxu0 0.0
    %192 = vmatprep.subr.mxu0 0.0
    %193 = vmatpush1.msra.mxu0 0.0
    %194 = vmatprep.subr.mxu0 0.0
    %195 = vmatpush1.msra.mxu0 0.0
    %196 = vmatprep.subr.mxu0 0.0
    %197 = vmatpush1.msra.mxu0 0.0
    %198 = vmatprep.subr.mxu0 0.0
    %199 = vmatpush1.msra.mxu0 0.0
    %200 = vmatprep.subr.mxu0 0.0
    %201 = vmatpush1.msra.mxu0 0.0
    %202 = vmatprep.mubr.f32.mxu0 0.0
    %203 = vmatmul.mubr.f32.gmra.mrb[0].mxu0 %v120
    %v204 = vpop.f32.mrb[0].mxu0
    %v205 = vadd.f32 0.0, %v204
    %v206 = vpop.f32.mrb[0].mxu0
    %207 = vdwg.mxu0
    %vm208 = vcmp.gt.f32.partialorder %v205, 0.0
    %v209 = vmul.f32 %v205, 0.2
    %v210 = vsel %vm208, %v205, %v209
    %s211 = scalar_lea.vmem [#allocation2], 256
    %v212 = vld [vmem:[%s211] sm:$0xff]
    %v213 = vld [vmem:[%s211 + $0x8] sm:$0xff]
    %v214 = vld [vmem:[%s211 + $0x10] sm:$0xff]
    %v215 = vld [vmem:[%s211 + $0x18] sm:$0xff]
    %v216 = vld [vmem:[%s211 + $0x20] sm:$0xff]
    %v217 = vld [vmem:[%s211 + $0x28] sm:$0xff]
    %v218 = vld [vmem:[%s211 + $0x30] sm:$0xff]
    %v219 = vld [vmem:[%s211 + $0x38] sm:$0xff]
    %v220 = vld [vmem:[%s211 + $0x40] sm:$0xff]
    %v221 = vld [vmem:[%s211 + $0x48] sm:$0xff]
    %v222 = vld [vmem:[%s211 + $0x50] sm:$0xff]
    %v223 = vld [vmem:[%s211 + $0x58] sm:$0xff]
    %v224 = vld [vmem:[%s211 + $0x60] sm:$0xff]
    %v225 = vld [vmem:[%s211 + $0x68] sm:$0xff]
    %v226 = vld [vmem:[%s211 + $0x70] sm:$0xff]
    %v227 = vld [vmem:[%s211 + $0x78] sm:$0xff]
    %228 = vmatprep.subr.mxu0 0.0
    %229 = vmatpush1.msra.mxu0 %v212
    %230 = vmatprep.subr.mxu0 0.0
    %231 = vmatpush1.msra.mxu0 %v213
    %232 = vmatprep.subr.mxu0 0.0
    %233 = vmatpush1.msra.mxu0 %v214
    %234 = vmatprep.subr.mxu0 0.0
    %235 = vmatpush1.msra.mxu0 %v215
    %236 = vmatprep.subr.mxu0 0.0
    %237 = vmatpush1.msra.mxu0 %v216
    %238 = vmatprep.subr.mxu0 0.0
    %239 = vmatpush1.msra.mxu0 %v217
    %240 = vmatprep.subr.mxu0 0.0
    %241 = vmatpush1.msra.mxu0 %v218
    %242 = vmatprep.subr.mxu0 0.0
    %243 = vmatpush1.msra.mxu0 %v219
    %244 = vmatprep.subr.mxu0 0.0
    %245 = vmatpush1.msra.mxu0 %v220
    %246 = vmatprep.subr.mxu0 0.0
    %247 = vmatpush1.msra.mxu0 %v221
    %248 = vmatprep.subr.mxu0 0.0
    %249 = vmatpush1.msra.mxu0 %v222
    %250 = vmatprep.subr.mxu0 0.0
    %251 = vmatpush1.msra.mxu0 %v223
    %252 = vmatprep.subr.mxu0 0.0
    %253 = vmatpush1.msra.mxu0 %v224
    %254 = vmatprep.subr.mxu0 0.0
    %255 = vmatpush1.msra.mxu0 %v225
    %256 = vmatprep.subr.mxu0 0.0
    %257 = vmatpush1.msra.mxu0 %v226
    %258 = vmatprep.subr.mxu0 0.0
    %259 = vmatpush1.msra.mxu0 %v227
    %260 = vmatprep.subr.mxu0 0.0
    %261 = vmatpush1.msra.mxu0 0.0
    %262 = vmatprep.subr.mxu0 0.0
    %263 = vmatpush1.msra.mxu0 0.0
    %264 = vmatprep.subr.mxu0 0.0
    %265 = vmatpush1.msra.mxu0 0.0
    %266 = vmatprep.subr.mxu0 0.0
    %267 = vmatpush1.msra.mxu0 0.0
    %268 = vmatprep.subr.mxu0 0.0
    %269 = vmatpush1.msra.mxu0 0.0
    %270 = vmatprep.subr.mxu0 0.0
    %271 = vmatpush1.msra.mxu0 0.0
    %272 = vmatprep.subr.mxu0 0.0
    %273 = vmatpush1.msra.mxu0 0.0
    %274 = vmatprep.subr.mxu0 0.0
    %275 = vmatpush1.msra.mxu0 0.0
    %276 = vmatprep.subr.mxu0 0.0
    %277 = vmatpush1.msra.mxu0 0.0
    %278 = vmatprep.subr.mxu0 0.0
    %279 = vmatpush1.msra.mxu0 0.0
    %280 = vmatprep.subr.mxu0 0.0
    %281 = vmatpush1.msra.mxu0 0.0
    %282 = vmatprep.subr.mxu0 0.0
    %283 = vmatpush1.msra.mxu0 0.0
    %284 = vmatprep.subr.mxu0 0.0
    %285 = vmatpush1.msra.mxu0 0.0
    %286 = vmatprep.subr.mxu0 0.0
    %287 = vmatpush1.msra.mxu0 0.0
    %288 = vmatprep.subr.mxu0 0.0
    %289 = vmatpush1.msra.mxu0 0.0
    %290 = vmatprep.subr.mxu0 0.0
    %291 = vmatpush1.msra.mxu0 0.0
    %292 = vmatprep.mubr.f32.mxu0 0.0
    %293 = vmatmul.mubr.f32.gmra.mrb[0].mxu0 %v210
    %v294 = vpop.f32.mrb[0].mxu0
    %v295 = vadd.f32 0.0, %v294
    %v296 = vpop.f32.mrb[0].mxu0
    %297 = vdwg.mxu0
    %vm298 = vcmp.gt.f32.partialorder %v295, 0.0
    %v299 = vmul.f32 %v295, 0.2
    %v300 = vsel %vm298, %v295, %v299
    %s301 = scalar_lea.vmem [#allocation2], 384
    %v302 = vld [vmem:[%s301] sm:$0xff]
    %v303 = vld [vmem:[%s301 + $0x8] sm:$0xff]
    %v304 = vld [vmem:[%s301 + $0x10] sm:$0xff]
    %v305 = vld [vmem:[%s301 + $0x18] sm:$0xff]
    %v306 = vld [vmem:[%s301 + $0x20] sm:$0xff]
    %v307 = vld [vmem:[%s301 + $0x28] sm:$0xff]
    %v308 = vld [vmem:[%s301 + $0x30] sm:$0xff]
    %v309 = vld [vmem:[%s301 + $0x38] sm:$0xff]
    %v310 = vld [vmem:[%s301 + $0x40] sm:$0xff]
    %v311 = vld [vmem:[%s301 + $0x48] sm:$0xff]
    %v312 = vld [vmem:[%s301 + $0x50] sm:$0xff]
    %v313 = vld [vmem:[%s301 + $0x58] sm:$0xff]
    %v314 = vld [vmem:[%s301 + $0x60] sm:$0xff]
    %v315 = vld [vmem:[%s301 + $0x68] sm:$0xff]
    %v316 = vld [vmem:[%s301 + $0x70] sm:$0xff]
    %v317 = vld [vmem:[%s301 + $0x78] sm:$0xff]
    %318 = vmatprep.subr.mxu0 0.0
    %319 = vmatpush1.msra.mxu0 %v302
    %320 = vmatprep.subr.mxu0 0.0
    %321 = vmatpush1.msra.mxu0 %v303
    %322 = vmatprep.subr.mxu0 0.0
    %323 = vmatpush1.msra.mxu0 %v304
    %324 = vmatprep.subr.mxu0 0.0
    %325 = vmatpush1.msra.mxu0 %v305
    %326 = vmatprep.subr.mxu0 0.0
    %327 = vmatpush1.msra.mxu0 %v306
    %328 = vmatprep.subr.mxu0 0.0
    %329 = vmatpush1.msra.mxu0 %v307
    %330 = vmatprep.subr.mxu0 0.0
    %331 = vmatpush1.msra.mxu0 %v308
    %332 = vmatprep.subr.mxu0 0.0
    %333 = vmatpush1.msra.mxu0 %v309
    %334 = vmatprep.subr.mxu0 0.0
    %335 = vmatpush1.msra.mxu0 %v310
    %336 = vmatprep.subr.mxu0 0.0
    %337 = vmatpush1.msra.mxu0 %v311
    %338 = vmatprep.subr.mxu0 0.0
    %339 = vmatpush1.msra.mxu0 %v312
    %340 = vmatprep.subr.mxu0 0.0
    %341 = vmatpush1.msra.mxu0 %v313
    %342 = vmatprep.subr.mxu0 0.0
    %343 = vmatpush1.msra.mxu0 %v314
    %344 = vmatprep.subr.mxu0 0.0
    %345 = vmatpush1.msra.mxu0 %v315
    %346 = vmatprep.subr.mxu0 0.0
    %347 = vmatpush1.msra.mxu0 %v316
    %348 = vmatprep.subr.mxu0 0.0
    %349 = vmatpush1.msra.mxu0 %v317
    %350 = vmatprep.subr.mxu0 0.0
    %351 = vmatpush1.msra.mxu0 0.0
    %352 = vmatprep.subr.mxu0 0.0
    %353 = vmatpush1.msra.mxu0 0.0
    %354 = vmatprep.subr.mxu0 0.0
    %355 = vmatpush1.msra.mxu0 0.0
    %356 = vmatprep.subr.mxu0 0.0
    %357 = vmatpush1.msra.mxu0 0.0
    %358 = vmatprep.subr.mxu0 0.0
    %359 = vmatpush1.msra.mxu0 0.0
    %360 = vmatprep.subr.mxu0 0.0
    %361 = vmatpush1.msra.mxu0 0.0
    %362 = vmatprep.subr.mxu0 0.0
    %363 = vmatpush1.msra.mxu0 0.0
    %364 = vmatprep.subr.mxu0 0.0
    %365 = vmatpush1.msra.mxu0 0.0
    %366 = vmatprep.subr.mxu0 0.0
    %367 = vmatpush1.msra.mxu0 0.0
    %368 = vmatprep.subr.mxu0 0.0
    %369 = vmatpush1.msra.mxu0 0.0
    %370 = vmatprep.subr.mxu0 0.0
    %371 = vmatpush1.msra.mxu0 0.0
    %372 = vmatprep.subr.mxu0 0.0
    %373 = vmatpush1.msra.mxu0 0.0
    %374 = vmatprep.subr.mxu0 0.0
    %375 = vmatpush1.msra.mxu0 0.0
    %376 = vmatprep.subr.mxu0 0.0
    %377 = vmatpush1.msra.mxu0 0.0
    %378 = vmatprep.subr.mxu0 0.0
    %379 = vmatpush1.msra.mxu0 0.0
    %380 = vmatprep.subr.mxu0 0.0
    %381 = vmatpush1.msra.mxu0 0.0
    %382 = vmatprep.mubr.f32.mxu0 0.0
    %383 = vmatmul.mubr.f32.gmra.mrb[0].mxu0 %v300
    %v384 = vpop.f32.mrb[0].mxu0
    %v385 = vadd.f32 0.0, %v384
    %v386 = vpop.f32.mrb[0].mxu0
    %387 = vdwg.mxu0
    %388 = vst [vmem:[#allocation5] sm:$0xff] %v385
    // Predicated region
    $region18: #{tpu_custom_call.1} parent=1 // pred_check
      _
    $region19: #{tpu_custom_call.1} parent=1 // pred_check_branch
      %390 = sbr.rel (0) target = $region21
    $region20: #{tpu_custom_call.1} parent=1 // pred_region
      %s392 = ssub.s32 128, 128
      %393 = vsyncadd [#allocation4], %s392
      %s395 = sshll.u32 [#allocation5], 4
      %s396 = int_to_ptr.vmem [resolvable:$true] %s395
      %398 = dma.vmem_to_hbm [thread:$0]  %s396, 128, %s3, [#allocation4]
    $region21: #{tpu_custom_call.1} parent=1 // pred_fallthru
      _
    // Predicated region
    $region22: #{tpu_custom_call.1} parent=1 // pred_check
      _
    $region23: #{tpu_custom_call.1} parent=1 // pred_check_branch
      %400 = sbr.rel (0) target = $region25
    $region24: #{tpu_custom_call.1} parent=1 // pred_region
      %401 = dma.done [#allocation4], 128
    $region25: #{tpu_custom_call.1} parent=1 // pred_fallthru
      _
    %402 = vsyncpa [#allocation3], 1
    %403 = vsyncpa [#allocation4], 1

</llo_original>
